<compile_context>
chip_gen: v6e
topology: v6e:2x2x1
jax: 0.10.0
libtpu: 0.0.40
codegen_flags: <defaults>
</compile_context>

<pallas_src>
import functools

import numpy as np

import jax
import jax.numpy as jnp
from jax import lax
from jax.experimental import pallas as pl
from jax.experimental.pallas import tpu as pltpu

_EPS = 1e-5


# -----------------------------------------------------------------------------
# Host-side weight restructuring (weight-only; traced once per parameter set).
# -----------------------------------------------------------------------------
def _band_matrices(w, W_in, s):
    """3x3 conv (stride s, pad 1) as banded matmuls on width-folded rows.

    Input rows are grouped `s` at a time and lane-flattened to s*W_in*Cin.
    Returns (m_minus, m_zero, m_plus), each (s*W_in*Cin, (W_in//s)*Cout), with
        y[g] = r[g-1] @ m_minus + r[g] @ m_zero + r[g+1] @ m_plus
    (out-of-range row groups contribute zero = spatial zero padding).
    For s == 2, m_plus is identically zero and is dropped by the caller.
    """
    k_h, k_w, c_in, c_out = w.shape
    W_out = W_in // s
    sel = np.zeros((k_w, W_in, W_out), np.float32)
    for dx in range(k_w):
        for wo in range(W_out):
            wi = wo * s + dx - 1                       # pad=1 in the W direction
            if 0 <= wi < W_in:
                sel[dx, wi, wo] = 1.0
    sel = jnp.asarray(sel)
    mats = {off: jnp.zeros((s * W_in * c_in, W_out * c_out), jnp.float32)
            for off in (-1, 0, 1)}
    for dy in range(k_h):
        off = (dy - 1) // s             # neighbouring row-group this tap reads
        p = (dy - 1) % s                # row position inside that group
        m = jnp.einsum("xwv,xio->wivo", sel, w[dy])
        m = m.reshape(W_in * c_in, W_out * c_out)
        mats[off] = mats[off].at[p * W_in * c_in:(p + 1) * W_in * c_in, :].add(m)
    return mats[-1], mats[0], mats[1]


def _point_matrix(w_io, W_in, s):
    """1x1 conv (stride s, pad 0) as one matrix on the same folded row layout."""
    c_in, c_out = w_io.shape
    W_out = W_in // s
    sel = np.zeros((W_in, W_out), np.float32)
    for wo in range(W_out):
        sel[wo * s, wo] = 1.0
    m = jnp.einsum("wv,io->wivo", jnp.asarray(sel), w_io)
    m = m.reshape(W_in * c_in, W_out * c_out)
    full = jnp.zeros((s * W_in * c_in, W_out * c_out), jnp.float32)
    return full.at[:W_in * c_in, :].set(m)


# -----------------------------------------------------------------------------
# Fused kernel: whole problem VMEM-resident, lane-dense (Wo*Cout = lanes).
# -----------------------------------------------------------------------------
def _down_block_kernel(x_ref, w1_ref, w2_ref, fold_ref,
                       gb1_ref, gb2_ref, gbe_ref, o_ref, *,
                       n_img, ho, wo, c_out, conv1_has_plus):
    f32 = jnp.float32
    rows = n_img * ho                   # folded output rows (N * Ho)
    m1 = wo * c_out                     # lane width of one output row
    inv_count = 1.0 / float(rows * wo)  # elements per channel for BN stats

    x2f = x_ref[...]
    fold = fold_ref[...]

    # Image-boundary masks for the row-tap shifts (built once, reused).
    row_in_img = lax.broadcasted_iota(jnp.int32, (rows, m1), 0) % ho
    not_first = row_in_img != 0
    not_last = row_in_img != (ho - 1)
    zrow = jnp.zeros((1, m1), f32)

    # vreg-resident row shifts (replaces the old acc_ref read-modify-write):
    def shift_down(v):      # out[r] += v[r-1] inside each image, zero-padded
        return jnp.where(not_first,
                         jnp.concatenate([zrow, v[:rows - 1, :]], axis=0), 0.0)

    def shift_up(v):        # out[r] += v[r+1] inside each image, zero-padded
        return jnp.where(not_last,
                         jnp.concatenate([v[1:, :], zrow], axis=0), 0.0)

    def tile_lanes(v):      # (k, C) per-channel -> (k, Wo*C) lane layout (VPU/XLU)
        return jnp.concatenate([v] * wo, axis=1)

    def bn_coeffs(stat2, gb):
        # stat2 rows = [sum, sumsq] per channel; gb rows = [gamma, beta]  (2, C)
        mean = stat2[0:1, :] * inv_count
        # TODO(synk): E[x^2]-E[x]^2 cancels when |mean| >> std; switch to a
        # two-pass (x-mean)^2 reduction for non-toy activations.
        var = jnp.maximum(stat2[1:2, :] * inv_count - mean * mean, 0.0)
        scale = gb[0:1, :] * lax.rsqrt(var + _EPS)            # EUP slot
        shift = gb[1:2, :] - mean * scale
        return tile_lanes(jnp.concatenate([scale, shift], axis=0))   # (2, M1)

    # ---- conv1 (3x3, stride s1) + 1x1 shortcut: ONE wide MXU matmul --------
    r1 = jnp.dot(x2f, w1_ref[...], preferred_element_type=f32)
    pm1 = r1[:, 0:m1]
    pz1 = r1[:, m1:2 * m1]
    if conv1_has_plus:
        y1 = pz1 + shift_down(pm1) + shift_up(r1[:, 2 * m1:3 * m1])
        esc = r1[:, 3 * m1:4 * m1]
    else:                               # stride 2: plus-band is identically 0
        y1 = pz1 + shift_down(pm1)
        esc = r1[:, 2 * m1:3 * m1]

    # ---- BN1 + BN_extra statistics: ONE small fold matmul ------------------
    stats = jnp.concatenate(
        [jnp.sum(y1, axis=0, keepdims=True),
         jnp.sum(y1 * y1, axis=0, keepdims=True),
         jnp.sum(esc, axis=0, keepdims=True),
         jnp.sum(esc * esc, axis=0, keepdims=True)], axis=0)          # (4, M1)
    per_chan = jnp.dot(stats, fold, preferred_element_type=f32)       # (4, C)
    ss1 = bn_coeffs(per_chan[0:2, :], gb1_ref[...])
    sse = bn_coeffs(per_chan[2:4, :], gbe_ref[...])

    # BN1 + ReLU, single VPU sweep
    z1 = jnp.maximum(y1 * ss1[0:1, :] + ss1[1:2, :], 0.0)

    # ---- conv2 (3x3, stride 1): ONE wide MXU matmul -------------------------
    r2 = jnp.dot(z1.astype(w2_ref.dtype), w2_ref[...],
                 preferred_element_type=f32)
    y2 = (r2[:, m1:2 * m1] + shift_down(r2[:, 0:m1])
          + shift_up(r2[:, 2 * m1:3 * m1]))

    stats2 = jnp.concatenate(
        [jnp.sum(y2, axis=0, keepdims=True),
         jnp.sum(y2 * y2, axis=0, keepdims=True)], axis=0)            # (2, M1)
    per_chan2 = jnp.dot(stats2, fold, preferred_element_type=f32)     # (2, C)
    ss2 = bn_coeffs(per_chan2, gb2_ref[...])

    # BN2 + shortcut BN + residual add + ReLU: one sweep, lane-dense store
    o_ref[...] = jnp.maximum(
        y2 * ss2[0:1, :] + esc * sse[0:1, :] + (ss2[1:2, :] + sse[1:2, :]),
        0.0)


# -----------------------------------------------------------------------------
# Public wrapper (NCHW in / NCHW out, PyTorch convention).
# -----------------------------------------------------------------------------
@functools.partial(jax.jit, static_argnames=("stride", "mxu_dtype"))
def restnet_down_block(x_nchw, params, *, stride=(2, 1), mxu_dtype=jnp.bfloat16):
    s1, s2 = stride
    if s2 != 1:
        raise ValueError("conv2 stride must be 1 so the residual shapes match "
                         "(as in the reference module).")
    N, Cin, H, W = x_nchw.shape
    Cout = params["g1"].shape[0]
    assert H % s1 == 0 and W % s1 == 0, "H, W must be divisible by stride[0]"
    Ho, Wo = H // s1, W // s1
    L1 = s1 * W * Cin            # folded input-row lane width
    M1 = Wo * Cout               # folded output-row lane width
    R = N * Ho                   # folded output rows

    # NCHW -> NHWC -> width/channel-folded rows; bf16 feed for the MXU.
    x_nhwc = jnp.transpose(x_nchw, (0, 2, 3, 1)).astype(jnp.float32)
    x2 = x_nhwc.reshape(R, L1).astype(mxu_dtype)

    # Weight-only restructuring. Conv biases are intentionally dropped: the
    # training-mode BN mean subtraction right after each conv cancels them.
    w1 = jnp.transpose(params["w1"], (2, 3, 1, 0))           # (3,3,Cin,Cout)
    w2 = jnp.transpose(params["w2"], (2, 3, 1, 0))           # (3,3,Cout,Cout)
    wsc = jnp.transpose(params["we"][:, :, 0, 0], (1, 0))    # (Cin,Cout)
    m1m, m1z, m1p = _band_matrices(w1, W, s1)
    m2m, m2z, m2p = _band_matrices(w2, Wo, 1)
    msc = _point_matrix(wsc, W, s1)

    # One wide RHS per LHS: conv1 bands (+shortcut) and conv2 bands.
    conv1_has_plus = (s1 == 1)          # for stride 2 the plus band is all-zero
    w1_blocks = [m1m, m1z] + ([m1p] if conv1_has_plus else []) + [msc]
    w1cat = jnp.concatenate(w1_blocks, axis=1).astype(mxu_dtype)
    w2cat = jnp.concatenate([m2m, m2z, m2p], axis=1).astype(mxu_dtype)

    fold = jnp.asarray(np.tile(np.eye(Cout, dtype=np.float32), (Wo, 1)))  # (M1,C)
    gb = lambda g, b: jnp.stack([params[g], params[b]]).astype(jnp.float32)

    operands = (x2, w1cat, w2cat, fold,
                gb("g1", "be1"), gb("g2", "be2"), gb("ge", "bee"))

    # Honest cost estimate: FLOPs the kernel actually issues (dense bands).
    n1 = len(w1_blocks)
    flops = (2 * R * L1 * (n1 * M1)          # conv1 + shortcut wide matmul
             + 2 * R * M1 * (3 * M1)         # conv2 wide matmul
             + 2 * (4 + 2) * M1 * Cout)      # BN fold matmuls
    bytes_accessed = sum(int(a.size) * a.dtype.itemsize for a in operands) \
        + R * M1 * 4
    vmem = pl.BlockSpec(memory_space=pltpu.MemorySpace.VMEM)

    out = pl.pallas_call(
        functools.partial(_down_block_kernel, n_img=N, ho=Ho, wo=Wo,
                          c_out=Cout, conv1_has_plus=conv1_has_plus),
        out_shape=jax.ShapeDtypeStruct((R, M1), jnp.float32),
        in_specs=[vmem] * len(operands),
        out_specs=vmem,
        compiler_params=pltpu.CompilerParams(vmem_limit_bytes=32 * 1024 * 1024),
        cost_estimate=pl.CostEstimate(flops=int(flops),
                                      transcendentals=3 * Cout,
                                      bytes_accessed=int(bytes_accessed)),
    )(*operands)

    # folded rows -> NHWC -> NCHW
    return jnp.transpose(out.reshape(N, Ho, Wo, Cout), (0, 3, 1, 2))


# -----------------------------------------------------------------------------
# Parameters + pure-JAX reference (PyTorch semantics, training-mode BN).
# -----------------------------------------------------------------------------
def init_params(key, in_channels, out_channels):
    ks = jax.random.split(key, 6)
    c_in, c_out = in_channels, out_channels

    def conv_w(k, shape):
        bound = 1.0 / np.sqrt(shape[1] * shape[2] * shape[3])
        return jax.random.uniform(k, shape, jnp.float32, -bound, bound)

    return dict(
        w1=conv_w(ks[0], (c_out, c_in, 3, 3)),
        b1=0.1 * jax.random.normal(ks[1], (c_out,), jnp.float32),
        g1=jnp.ones((c_out,), jnp.float32), be1=jnp.zeros((c_out,), jnp.float32),
        w2=conv_w(ks[2], (c_out, c_out, 3, 3)),
        b2=0.1 * jax.random.normal(ks[3], (c_out,), jnp.float32),
        g2=jnp.ones((c_out,), jnp.float32), be2=jnp.zeros((c_out,), jnp.float32),
        we=conv_w(ks[4], (c_out, c_in, 1, 1)),
        web=0.1 * jax.random.normal(ks[5], (c_out,), jnp.float32),
        ge=jnp.ones((c_out,), jnp.float32), bee=jnp.zeros((c_out,), jnp.float32),
    )


def _reference(x, p, stride):
    s1, s2 = stride

    def conv(x, w, b, s, pad):
        y = lax.conv_general_dilated(
            x, w, window_strides=(s, s), padding=[(pad, pad), (pad, pad)],
            dimension_numbers=("NCHW", "OIHW", "NCHW"),
            precision=lax.Precision.HIGHEST)
        return y + b.reshape(1, -1, 1, 1)

    def bn(y, g, b):
        mean = jnp.mean(y, axis=(0, 2, 3), keepdims=True)
        var = jnp.mean((y - mean) ** 2, axis=(0, 2, 3), keepdims=True)
        return (y - mean) * lax.rsqrt(var + _EPS) * g.reshape(1, -1, 1, 1) \
            + b.reshape(1, -1, 1, 1)

    extra = bn(conv(x, p["we"], p["web"], s1, 0), p["ge"], p["bee"])
    t = jax.nn.relu(bn(conv(x, p["w1"], p["b1"], s1, 1), p["g1"], p["be1"]))
    t = bn(conv(t, p["w2"], p["b2"], s2, 1), p["g2"], p["be2"])
    return jax.nn.relu(extra + t)


if __name__ == "__main__":
    key = jax.random.PRNGKey(0)
    kx, kp = jax.random.split(key)

    N, Cin, H, W = 2, 4, 16, 16
    Cout = 16                      # Wo*Cout = 128 -> fully lane-dense slabs
    stride = (2, 1)                # canonical ResNet down-block strides

    x = jax.random.normal(kx, (N, Cin, H, W), jnp.float32)
    params = init_params(kp, Cin, Cout)
    y_ref = _reference(x, params, stride)

    # f32 MXU path: structural correctness vs. the pure-JAX/XLA reference.
    y32 = restnet_down_block(x, params, stride=stride, mxu_dtype=jnp.float32)
    jax.block_until_ready(y32)
    assert y32.shape == (N, Cout, H // 2, W // 2) and y32.dtype == jnp.float32
    assert float(jnp.max(jnp.abs(y32 - y_ref))) < 2e-2

    # bf16 MXU operands with f32 accumulation: production path (v5e/v6e/v7x).
    # Accepted error budget: bf16 operand rounding between conv1 and conv2.
    y = restnet_down_block(x, params, stride=stride, mxu_dtype=jnp.bfloat16)
    jax.block_until_ready(y)
    assert y.shape == (N, Cout, H // 2, W // 2) and y.dtype == jnp.float32
    assert float(jnp.max(jnp.abs(y - y_ref))) < 1e-1

    print("KERNEL_OK")
</pallas_src>

<mosaic_0001>
module attributes {stable_mosaic.version = 11 : i64} {
  func.func @_down_block_kernel(%arg0: memref<16x128xf32, #tpu.memory_space<vmem>>, %arg1: memref<128x384xf32, #tpu.memory_space<vmem>>, %arg2: memref<128x384xf32, #tpu.memory_space<vmem>>, %arg3: memref<128x16xf32, #tpu.memory_space<vmem>>, %arg4: memref<2x16xf32, #tpu.memory_space<vmem>>, %arg5: memref<2x16xf32, #tpu.memory_space<vmem>>, %arg6: memref<2x16xf32, #tpu.memory_space<vmem>>, %arg7: memref<16x128xf32, #tpu.memory_space<vmem>>) attributes {dimension_semantics = [], scalar_prefetch = 0 : i64, scratch_operands = 0 : i64, tpu.core_type = #tpu.core_type<tc>} {
    %c0 = arith.constant 0 : index
    %c0_0 = arith.constant 0 : index
    %0 = vector.load %arg0[%c0, %c0_0] : memref<16x128xf32, #tpu.memory_space<vmem>>, vector<16x128xf32>
    %c0_1 = arith.constant 0 : index
    %c0_2 = arith.constant 0 : index
    %1 = vector.load %arg3[%c0_1, %c0_2] : memref<128x16xf32, #tpu.memory_space<vmem>>, vector<128x16xf32>
    %2 = tpu.iota {dimensions = array<i32: 0>} : vector<16x128xi32>
    %c8_i32 = arith.constant 8 : i32
    %c0_i32 = arith.constant 0 : i32
    %3 = arith.cmpi eq, %c8_i32, %c0_i32 : i32
    %c1_i32 = arith.constant 1 : i32
    %4 = arith.select %3, %c1_i32, %c8_i32 : i32
    %5 = vector.broadcast %4 : i32 to vector<16x128xi32>
    %6 = arith.remsi %2, %5 : vector<16x128xi32>
    %c0_i32_3 = arith.constant 0 : i32
    %7 = vector.broadcast %c0_i32_3 : i32 to vector<16x128xi32>
    %8 = arith.cmpi ne, %6, %7 : vector<16x128xi32>
    %c0_i32_4 = arith.constant 0 : i32
    %9 = vector.broadcast %c0_i32_4 : i32 to vector<16x128xi32>
    %10 = arith.cmpi slt, %6, %9 : vector<16x128xi32>
    %c0_i32_5 = arith.constant 0 : i32
    %11 = arith.cmpi slt, %4, %c0_i32_5 : i32
    %12 = vector.broadcast %11 : i1 to vector<16x128xi1>
    %13 = vector.broadcast %12 : vector<16x128xi1> to vector<16x128xi1>
    %14 = arith.xori %10, %13 : vector<16x128xi1>
    %15 = arith.andi %14, %8 : vector<16x128xi1>
    %16 = vector.broadcast %4 : i32 to vector<16x128xi32>
    %17 = arith.addi %6, %16 : vector<16x128xi32>
    %18 = arith.select %15, %17, %6 : vector<16x128xi1>, vector<16x128xi32>
    %c0_i32_6 = arith.constant 0 : i32
    %19 = vector.broadcast %c0_i32_6 : i32 to vector<16x128xi32>
    %20 = arith.cmpi ne, %18, %19 : vector<16x128xi32>
    %c7_i32 = arith.constant 7 : i32
    %21 = vector.broadcast %c7_i32 : i32 to vector<16x128xi32>
    %22 = arith.cmpi ne, %18, %21 : vector<16x128xi32>
    %cst = arith.constant 0.000000e+00 : f32
    %23 = vector.broadcast %cst : f32 to vector<1x128xf32>
    %c0_7 = arith.constant 0 : index
    %c0_8 = arith.constant 0 : index
    %24 = vector.load %arg1[%c0_7, %c0_8] : memref<128x384xf32, #tpu.memory_space<vmem>>, vector<128x384xf32>
    %cst_9 = arith.constant dense<0.000000e+00> : vector<16x384xf32>
    %25 = tpu.matmul %0, %24, %cst_9 {dimension_numbers = #tpu.dot_dimension_numbers<[1], [0], [0], [1], [0, 0, 1, 1], [], []>} : vector<16x128xf32>, vector<128x384xf32>, vector<16x384xf32> -> vector<16x384xf32>
    %26 = vector.extract_strided_slice %25 {offsets = [0, 0], sizes = [16, 128], strides = [1, 1]} : vector<16x384xf32> to vector<16x128xf32>
    %27 = vector.extract_strided_slice %25 {offsets = [0, 128], sizes = [16, 128], strides = [1, 1]} : vector<16x384xf32> to vector<16x128xf32>
    %28 = vector.extract_strided_slice %26 {offsets = [0, 0], sizes = [15, 128], strides = [1, 1]} : vector<16x128xf32> to vector<15x128xf32>
    %29 = tpu.concatenate %23, %28 in 0 : vector<1x128xf32>, vector<15x128xf32> -> vector<16x128xf32>
    %cst_10 = arith.constant 0.000000e+00 : f32
    %30 = vector.broadcast %cst_10 : f32 to vector<16x128xf32>
    %31 = arith.select %20, %29, %30 : vector<16x128xi1>, vector<16x128xf32>
    %32 = arith.addf %27, %31 : vector<16x128xf32>
    %33 = vector.extract_strided_slice %25 {offsets = [0, 256], sizes = [16, 128], strides = [1, 1]} : vector<16x384xf32> to vector<16x128xf32>
    %cst_11 = arith.constant dense<0.000000e+00> : vector<128xf32>
    %34 = vector.multi_reduction <add>, %32, %cst_11 [0] : vector<16x128xf32> to vector<128xf32>
    %35 = vector.shape_cast %34 : vector<128xf32> to vector<1x128xf32>
    %36 = arith.mulf %32, %32 : vector<16x128xf32>
    %cst_12 = arith.constant dense<0.000000e+00> : vector<128xf32>
    %37 = vector.multi_reduction <add>, %36, %cst_12 [0] : vector<16x128xf32> to vector<128xf32>
    %38 = vector.shape_cast %37 : vector<128xf32> to vector<1x128xf32>
    %cst_13 = arith.constant dense<0.000000e+00> : vector<128xf32>
    %39 = vector.multi_reduction <add>, %33, %cst_13 [0] : vector<16x128xf32> to vector<128xf32>
    %40 = vector.shape_cast %39 : vector<128xf32> to vector<1x128xf32>
    %41 = arith.mulf %33, %33 : vector<16x128xf32>
    %cst_14 = arith.constant dense<0.000000e+00> : vector<128xf32>
    %42 = vector.multi_reduction <add>, %41, %cst_14 [0] : vector<16x128xf32> to vector<128xf32>
    %43 = vector.shape_cast %42 : vector<128xf32> to vector<1x128xf32>
    %44 = tpu.concatenate %35, %38, %40, %43 in 0 : vector<1x128xf32>, vector<1x128xf32>, vector<1x128xf32>, vector<1x128xf32> -> vector<4x128xf32>
    %cst_15 = arith.constant dense<0.000000e+00> : vector<4x16xf32>
    %45 = tpu.matmul %44, %1, %cst_15 {dimension_numbers = #tpu.dot_dimension_numbers<[1], [0], [0], [1], [0, 0, 1, 1], [], []>} : vector<4x128xf32>, vector<128x16xf32>, vector<4x16xf32> -> vector<4x16xf32>
    %46 = vector.extract_strided_slice %45 {offsets = [0, 0], sizes = [2, 16], strides = [1, 1]} : vector<4x16xf32> to vector<2x16xf32>
    %c0_16 = arith.constant 0 : index
    %c0_17 = arith.constant 0 : index
    %47 = vector.load %arg4[%c0_16, %c0_17] : memref<2x16xf32, #tpu.memory_space<vmem>>, vector<2x16xf32>
    %48 = vector.extract_strided_slice %46 {offsets = [0, 0], sizes = [1, 16], strides = [1, 1]} : vector<2x16xf32> to vector<1x16xf32>
    %cst_18 = arith.constant 7.812500e-03 : f32
    %49 = vector.broadcast %cst_18 : f32 to vector<1x16xf32>
    %50 = arith.mulf %48, %49 : vector<1x16xf32>
    %51 = vector.extract_strided_slice %46 {offsets = [1, 0], sizes = [1, 16], strides = [1, 1]} : vector<2x16xf32> to vector<1x16xf32>
    %cst_19 = arith.constant 7.812500e-03 : f32
    %52 = vector.broadcast %cst_19 : f32 to vector<1x16xf32>
    %53 = arith.mulf %51, %52 : vector<1x16xf32>
    %54 = arith.mulf %50, %50 : vector<1x16xf32>
    %55 = arith.subf %53, %54 : vector<1x16xf32>
    %cst_20 = arith.constant 0.000000e+00 : f32
    %56 = vector.broadcast %cst_20 : f32 to vector<1x16xf32>
    %57 = arith.maximumf %55, %56 : vector<1x16xf32>
    %58 = vector.extract_strided_slice %47 {offsets = [0, 0], sizes = [1, 16], strides = [1, 1]} : vector<2x16xf32> to vector<1x16xf32>
    %cst_21 = arith.constant 9.99999974E-6 : f32
    %59 = vector.broadcast %cst_21 : f32 to vector<1x16xf32>
    %60 = arith.addf %57, %59 : vector<1x16xf32>
    %61 = math.rsqrt %60 : vector<1x16xf32>
    %62 = arith.mulf %58, %61 : vector<1x16xf32>
    %63 = vector.extract_strided_slice %47 {offsets = [1, 0], sizes = [1, 16], strides = [1, 1]} : vector<2x16xf32> to vector<1x16xf32>
    %64 = arith.mulf %50, %62 : vector<1x16xf32>
    %65 = arith.subf %63, %64 : vector<1x16xf32>
    %66 = tpu.concatenate %62, %65 in 0 : vector<1x16xf32>, vector<1x16xf32> -> vector<2x16xf32>
    %67 = tpu.concatenate %66, %66, %66, %66, %66, %66, %66, %66 in 1 : vector<2x16xf32>, vector<2x16xf32>, vector<2x16xf32>, vector<2x16xf32>, vector<2x16xf32>, vector<2x16xf32>, vector<2x16xf32>, vector<2x16xf32> -> vector<2x128xf32>
    %68 = vector.extract_strided_slice %45 {offsets = [2, 0], sizes = [2, 16], strides = [1, 1]} : vector<4x16xf32> to vector<2x16xf32>
    %c0_22 = arith.constant 0 : index
    %c0_23 = arith.constant 0 : index
    %69 = vector.load %arg6[%c0_22, %c0_23] : memref<2x16xf32, #tpu.memory_space<vmem>>, vector<2x16xf32>
    %70 = vector.extract_strided_slice %68 {offsets = [0, 0], sizes = [1, 16], strides = [1, 1]} : vector<2x16xf32> to vector<1x16xf32>
    %cst_24 = arith.constant 7.812500e-03 : f32
    %71 = vector.broadcast %cst_24 : f32 to vector<1x16xf32>
    %72 = arith.mulf %70, %71 : vector<1x16xf32>
    %73 = vector.extract_strided_slice %68 {offsets = [1, 0], sizes = [1, 16], strides = [1, 1]} : vector<2x16xf32> to vector<1x16xf32>
    %cst_25 = arith.constant 7.812500e-03 : f32
    %74 = vector.broadcast %cst_25 : f32 to vector<1x16xf32>
    %75 = arith.mulf %73, %74 : vector<1x16xf32>
    %76 = arith.mulf %72, %72 : vector<1x16xf32>
    %77 = arith.subf %75, %76 : vector<1x16xf32>
    %cst_26 = arith.constant 0.000000e+00 : f32
    %78 = vector.broadcast %cst_26 : f32 to vector<1x16xf32>
    %79 = arith.maximumf %77, %78 : vector<1x16xf32>
    %80 = vector.extract_strided_slice %69 {offsets = [0, 0], sizes = [1, 16], strides = [1, 1]} : vector<2x16xf32> to vector<1x16xf32>
    %cst_27 = arith.constant 9.99999974E-6 : f32
    %81 = vector.broadcast %cst_27 : f32 to vector<1x16xf32>
    %82 = arith.addf %79, %81 : vector<1x16xf32>
    %83 = math.rsqrt %82 : vector<1x16xf32>
    %84 = arith.mulf %80, %83 : vector<1x16xf32>
    %85 = vector.extract_strided_slice %69 {offsets = [1, 0], sizes = [1, 16], strides = [1, 1]} : vector<2x16xf32> to vector<1x16xf32>
    %86 = arith.mulf %72, %84 : vector<1x16xf32>
    %87 = arith.subf %85, %86 : vector<1x16xf32>
    %88 = tpu.concatenate %84, %87 in 0 : vector<1x16xf32>, vector<1x16xf32> -> vector<2x16xf32>
    %89 = tpu.concatenate %88, %88, %88, %88, %88, %88, %88, %88 in 1 : vector<2x16xf32>, vector<2x16xf32>, vector<2x16xf32>, vector<2x16xf32>, vector<2x16xf32>, vector<2x16xf32>, vector<2x16xf32>, vector<2x16xf32> -> vector<2x128xf32>
    %90 = vector.extract_strided_slice %67 {offsets = [0, 0], sizes = [1, 128], strides = [1, 1]} : vector<2x128xf32> to vector<1x128xf32>
    %91 = vector.broadcast %90 : vector<1x128xf32> to vector<16x128xf32>
    %92 = arith.mulf %32, %91 : vector<16x128xf32>
    %93 = vector.extract_strided_slice %67 {offsets = [1, 0], sizes = [1, 128], strides = [1, 1]} : vector<2x128xf32> to vector<1x128xf32>
    %94 = vector.broadcast %93 : vector<1x128xf32> to vector<16x128xf32>
    %95 = arith.addf %92, %94 : vector<16x128xf32>
    %cst_28 = arith.constant 0.000000e+00 : f32
    %96 = vector.broadcast %cst_28 : f32 to vector<16x128xf32>
    %97 = arith.maximumf %95, %96 : vector<16x128xf32>
    %c0_29 = arith.constant 0 : index
    %c0_30 = arith.constant 0 : index
    %98 = vector.load %arg2[%c0_29, %c0_30] : memref<128x384xf32, #tpu.memory_space<vmem>>, vector<128x384xf32>
    %cst_31 = arith.constant dense<0.000000e+00> : vector<16x384xf32>
    %99 = tpu.matmul %97, %98, %cst_31 {dimension_numbers = #tpu.dot_dimension_numbers<[1], [0], [0], [1], [0, 0, 1, 1], [], []>} : vector<16x128xf32>, vector<128x384xf32>, vector<16x384xf32> -> vector<16x384xf32>
    %100 = vector.extract_strided_slice %99 {offsets = [0, 128], sizes = [16, 128], strides = [1, 1]} : vector<16x384xf32> to vector<16x128xf32>
    %101 = vector.extract_strided_slice %99 {offsets = [0, 0], sizes = [16, 128], strides = [1, 1]} : vector<16x384xf32> to vector<16x128xf32>
    %102 = vector.extract_strided_slice %101 {offsets = [0, 0], sizes = [15, 128], strides = [1, 1]} : vector<16x128xf32> to vector<15x128xf32>
    %103 = tpu.concatenate %23, %102 in 0 : vector<1x128xf32>, vector<15x128xf32> -> vector<16x128xf32>
    %cst_32 = arith.constant 0.000000e+00 : f32
    %104 = vector.broadcast %cst_32 : f32 to vector<16x128xf32>
    %105 = arith.select %20, %103, %104 : vector<16x128xi1>, vector<16x128xf32>
    %106 = arith.addf %100, %105 : vector<16x128xf32>
    %107 = vector.extract_strided_slice %99 {offsets = [0, 256], sizes = [16, 128], strides = [1, 1]} : vector<16x384xf32> to vector<16x128xf32>
    %108 = vector.extract_strided_slice %107 {offsets = [1, 0], sizes = [15, 128], strides = [1, 1]} : vector<16x128xf32> to vector<15x128xf32>
    %109 = tpu.concatenate %108, %23 in 0 : vector<15x128xf32>, vector<1x128xf32> -> vector<16x128xf32>
    %cst_33 = arith.constant 0.000000e+00 : f32
    %110 = vector.broadcast %cst_33 : f32 to vector<16x128xf32>
    %111 = arith.select %22, %109, %110 : vector<16x128xi1>, vector<16x128xf32>
    %112 = arith.addf %106, %111 : vector<16x128xf32>
    %cst_34 = arith.constant dense<0.000000e+00> : vector<128xf32>
    %113 = vector.multi_reduction <add>, %112, %cst_34 [0] : vector<16x128xf32> to vector<128xf32>
    %114 = vector.shape_cast %113 : vector<128xf32> to vector<1x128xf32>
    %115 = arith.mulf %112, %112 : vector<16x128xf32>
    %cst_35 = arith.constant dense<0.000000e+00> : vector<128xf32>
    %116 = vector.multi_reduction <add>, %115, %cst_35 [0] : vector<16x128xf32> to vector<128xf32>
    %117 = vector.shape_cast %116 : vector<128xf32> to vector<1x128xf32>
    %118 = tpu.concatenate %114, %117 in 0 : vector<1x128xf32>, vector<1x128xf32> -> vector<2x128xf32>
    %cst_36 = arith.constant dense<0.000000e+00> : vector<2x16xf32>
    %119 = tpu.matmul %118, %1, %cst_36 {dimension_numbers = #tpu.dot_dimension_numbers<[1], [0], [0], [1], [0, 0, 1, 1], [], []>} : vector<2x128xf32>, vector<128x16xf32>, vector<2x16xf32> -> vector<2x16xf32>
    %c0_37 = arith.constant 0 : index
    %c0_38 = arith.constant 0 : index
    %120 = vector.load %arg5[%c0_37, %c0_38] : memref<2x16xf32, #tpu.memory_space<vmem>>, vector<2x16xf32>
    %121 = vector.extract_strided_slice %119 {offsets = [0, 0], sizes = [1, 16], strides = [1, 1]} : vector<2x16xf32> to vector<1x16xf32>
    %cst_39 = arith.constant 7.812500e-03 : f32
    %122 = vector.broadcast %cst_39 : f32 to vector<1x16xf32>
    %123 = arith.mulf %121, %122 : vector<1x16xf32>
    %124 = vector.extract_strided_slice %119 {offsets = [1, 0], sizes = [1, 16], strides = [1, 1]} : vector<2x16xf32> to vector<1x16xf32>
    %cst_40 = arith.constant 7.812500e-03 : f32
    %125 = vector.broadcast %cst_40 : f32 to vector<1x16xf32>
    %126 = arith.mulf %124, %125 : vector<1x16xf32>
    %127 = arith.mulf %123, %123 : vector<1x16xf32>
    %128 = arith.subf %126, %127 : vector<1x16xf32>
    %cst_41 = arith.constant 0.000000e+00 : f32
    %129 = vector.broadcast %cst_41 : f32 to vector<1x16xf32>
    %130 = arith.maximumf %128, %129 : vector<1x16xf32>
    %131 = vector.extract_strided_slice %120 {offsets = [0, 0], sizes = [1, 16], strides = [1, 1]} : vector<2x16xf32> to vector<1x16xf32>
    %cst_42 = arith.constant 9.99999974E-6 : f32
    %132 = vector.broadcast %cst_42 : f32 to vector<1x16xf32>
    %133 = arith.addf %130, %132 : vector<1x16xf32>
    %134 = math.rsqrt %133 : vector<1x16xf32>
    %135 = arith.mulf %131, %134 : vector<1x16xf32>
    %136 = vector.extract_strided_slice %120 {offsets = [1, 0], sizes = [1, 16], strides = [1, 1]} : vector<2x16xf32> to vector<1x16xf32>
    %137 = arith.mulf %123, %135 : vector<1x16xf32>
    %138 = arith.subf %136, %137 : vector<1x16xf32>
    %139 = tpu.concatenate %135, %138 in 0 : vector<1x16xf32>, vector<1x16xf32> -> vector<2x16xf32>
    %140 = tpu.concatenate %139, %139, %139, %139, %139, %139, %139, %139 in 1 : vector<2x16xf32>, vector<2x16xf32>, vector<2x16xf32>, vector<2x16xf32>, vector<2x16xf32>, vector<2x16xf32>, vector<2x16xf32>, vector<2x16xf32> -> vector<2x128xf32>
    %141 = vector.extract_strided_slice %140 {offsets = [0, 0], sizes = [1, 128], strides = [1, 1]} : vector<2x128xf32> to vector<1x128xf32>
    %142 = vector.broadcast %141 : vector<1x128xf32> to vector<16x128xf32>
    %143 = arith.mulf %112, %142 : vector<16x128xf32>
    %144 = vector.extract_strided_slice %89 {offsets = [0, 0], sizes = [1, 128], strides = [1, 1]} : vector<2x128xf32> to vector<1x128xf32>
    %145 = vector.broadcast %144 : vector<1x128xf32> to vector<16x128xf32>
    %146 = arith.mulf %33, %145 : vector<16x128xf32>
    %147 = arith.addf %143, %146 : vector<16x128xf32>
    %148 = vector.extract_strided_slice %140 {offsets = [1, 0], sizes = [1, 128], strides = [1, 1]} : vector<2x128xf32> to vector<1x128xf32>
    %149 = vector.extract_strided_slice %89 {offsets = [1, 0], sizes = [1, 128], strides = [1, 1]} : vector<2x128xf32> to vector<1x128xf32>
    %150 = arith.addf %148, %149 : vector<1x128xf32>
    %151 = vector.broadcast %150 : vector<1x128xf32> to vector<16x128xf32>
    %152 = arith.addf %147, %151 : vector<16x128xf32>
    %cst_43 = arith.constant 0.000000e+00 : f32
    %153 = vector.broadcast %cst_43 : f32 to vector<16x128xf32>
    %154 = arith.maximumf %152, %153 : vector<16x128xf32>
    %c0_44 = arith.constant 0 : index
    %c0_45 = arith.constant 0 : index
    %155 = vector.load %arg7[%c0_44, %c0_45] : memref<16x128xf32, #tpu.memory_space<vmem>>, vector<16x128xf32>
    tpu.vector_store %arg7[%c0_44, %c0_45], %154 {strides = array<i32>} : memref<16x128xf32, #tpu.memory_space<vmem>>, vector<16x128xf32>,
    return
  }
}

</mosaic_0001>

<llo_original>
// kernel: restnet_down_block.1
$region0: #{restnet_down_block.1}
  #allocation0 [shape = 'u32[]', space=smem, size = 0x4, offset = 0x4, fixed_abs, tag = 'smem constant byte address 0x4 - core index']
  #allocation1 [shape = 'u32[144,128]{1,0:T(1,128)}', space=vmem, size = 0x12000, scoped, tag = 'internal scratch']
  %s0 = inlined_call_operand.vmem [shape: f32[16,128], index: 0, kind: input, shape index: {}]
  %s1 = inlined_call_operand.vmem [shape: f32[128,384], index: 1, kind: input, shape index: {}]
  %s2 = inlined_call_operand.vmem [shape: f32[128,384], index: 2, kind: input, shape index: {}]
  %s3 = inlined_call_operand.vmem [shape: f32[128,16], index: 3, kind: input, shape index: {}]
  %s4 = inlined_call_operand.vmem [shape: f32[2,16], index: 4, kind: input, shape index: {}]
  %s5 = inlined_call_operand.vmem [shape: f32[2,16], index: 5, kind: input, shape index: {}]
  %s6 = inlined_call_operand.vmem [shape: f32[2,16], index: 6, kind: input, shape index: {}]
  %s7 = inlined_call_operand.vmem [shape: f32[16,128], index: 7, kind: output, shape index: {}]
  %s8 = sld [smem:[#allocation0]]
  $region38: #{restnet_down_block.1} parent=0
    _
  %s10 = ssub.s32 1, %s8
  %s11 = scalar_select 0, %s10, %s8
  // Predicated region
  $region2: #{restnet_down_block.1} parent=0 // pred_check
    _
  $region3: #{restnet_down_block.1} parent=0 // pred_check_branch
    %13 = sbr.rel (0) target = $region5
  $region4: #{restnet_down_block.1} parent=0 // pred_region
    _
  $region5: #{restnet_down_block.1} parent=0 // pred_fallthru
    _
  // Predicated region
  $region6: #{restnet_down_block.1} parent=0 // pred_check
    _
  $region7: #{restnet_down_block.1} parent=0 // pred_check_branch
    %15 = sbr.rel (0) target = $region9
  $region8: #{restnet_down_block.1} parent=0 // pred_region
    _
  $region9: #{restnet_down_block.1} parent=0 // pred_fallthru
    _
  // Predicated region
  $region10: #{restnet_down_block.1} parent=0 // pred_check
    _
  $region11: #{restnet_down_block.1} parent=0 // pred_check_branch
    %17 = sbr.rel (0) target = $region13
  $region12: #{restnet_down_block.1} parent=0 // pred_region
    _
  $region13: #{restnet_down_block.1} parent=0 // pred_fallthru
    _
  // Predicated region
  $region14: #{restnet_down_block.1} parent=0 // pred_check
    _
  $region15: #{restnet_down_block.1} parent=0 // pred_check_branch
    %19 = sbr.rel (0) target = $region17
  $region16: #{restnet_down_block.1} parent=0 // pred_region
    _
  $region17: #{restnet_down_block.1} parent=0 // pred_fallthru
    _
  // Predicated region
  $region18: #{restnet_down_block.1} parent=0 // pred_check
    _
  $region19: #{restnet_down_block.1} parent=0 // pred_check_branch
    %21 = sbr.rel (0) target = $region21
  $region20: #{restnet_down_block.1} parent=0 // pred_region
    _
  $region21: #{restnet_down_block.1} parent=0 // pred_fallthru
    _
  // Predicated region
  $region22: #{restnet_down_block.1} parent=0 // pred_check
    _
  $region23: #{restnet_down_block.1} parent=0 // pred_check_branch
    %23 = sbr.rel (0) target = $region25
  $region24: #{restnet_down_block.1} parent=0 // pred_region
    _
  $region25: #{restnet_down_block.1} parent=0 // pred_fallthru
    _
  // Predicated region
  $region26: #{restnet_down_block.1} parent=0 // pred_check
    _
  $region27: #{restnet_down_block.1} parent=0 // pred_check_branch
    %25 = sbr.rel (0) target = $region29
  $region28: #{restnet_down_block.1} parent=0 // pred_region
    _
  $region29: #{restnet_down_block.1} parent=0 // pred_fallthru
    _
  %v26 = vld [vmem:[%s0] sm:$0xff]
  %v27 = vld [vmem:[%s0 + $0x8] sm:$0xff]
  %v28 = vld [vmem:[%s3] sm:$0xff]
  %v29 = vld [vmem:[%s3 + $0x8] sm:$0xff]
  %v30 = vld [vmem:[%s3 + $0x10] sm:$0xff]
  %v31 = vld [vmem:[%s3 + $0x18] sm:$0xff]
  %v32 = vld [vmem:[%s3 + $0x20] sm:$0xff]
  %v33 = vld [vmem:[%s3 + $0x28] sm:$0xff]
  %v34 = vld [vmem:[%s3 + $0x30] sm:$0xff]
  %v35 = vld [vmem:[%s3 + $0x38] sm:$0xff]
  %v36 = vld [vmem:[%s3 + $0x40] sm:$0xff]
  %v37 = vld [vmem:[%s3 + $0x48] sm:$0xff]
  %v38 = vld [vmem:[%s3 + $0x50] sm:$0xff]
  %v39 = vld [vmem:[%s3 + $0x58] sm:$0xff]
  %v40 = vld [vmem:[%s3 + $0x60] sm:$0xff]
  %v41 = vld [vmem:[%s3 + $0x68] sm:$0xff]
  %v42 = vld [vmem:[%s3 + $0x70] sm:$0xff]
  %v43 = vld [vmem:[%s3 + $0x78] sm:$0xff]
  %v44 = vlaneseq
  %v45 = vshrl.u32 %v44, 7
  %v46 = vadd.s32 %v45, 8
  %vm47 = vcmp.lt.s32.totalorder %v45, 0
  %v48 = vsub.s32 0, %v45
  %v49 = vsel %vm47, %v48, %v45
  %v50 = vshrl.u32 %v49, 3
  %v51 = vand.u32 %v49, 7
  %v52 = vsub.s32 0, %v51
  %v53 = vsel %vm47, %v52, %v51
  %vm54 = vcmp.lt.s32.totalorder %v46, 0
  %v55 = vsub.s32 0, %v46
  %v56 = vsel %vm54, %v55, %v46
  %v57 = vshrl.u32 %v56, 3
  %v58 = vand.u32 %v56, 7
  %v59 = vsub.s32 0, %v58
  %v60 = vsel %vm54, %v59, %v58
  %vm61 = vcmp.ne.s32.totalorder %v53, 0
  %vm62 = vcmp.ne.s32.totalorder %v60, 0
  %vm63 = vcmp.lt.s32.totalorder %v53, 0
  %vm64 = vcmp.lt.s32.totalorder %v60, 0
  %vm65 = vmand %vm63, %vm61
  %vm66 = vmand %vm64, %vm62
  %v67 = vadd.s32 %v53, 8
  %v68 = vadd.s32 %v60, 8
  %v69 = vsel %vm65, %v67, %v53
  %v70 = vsel %vm66, %v68, %v60
  %vm71 = vcmp.ne.s32.totalorder %v69, 0
  %vm72 = vcmp.ne.s32.totalorder %v70, 0
  %vm73 = vcmp.ne.s32.totalorder %v69, 7
  %vm74 = vcmp.ne.s32.totalorder %v70, 7
  %v75 = vld [vmem:[%s1] sm:$0xff]
  %v76 = vld [vmem:[%s1 + $0x8] sm:$0xff]
  %v77 = vld [vmem:[%s1 + $0x10] sm:$0xff]
  %v78 = vld [vmem:[%s1 + $0x18] sm:$0xff]
  %v79 = vld [vmem:[%s1 + $0x20] sm:$0xff]
  %v80 = vld [vmem:[%s1 + $0x28] sm:$0xff]
  %v81 = vld [vmem:[%s1 + $0x30] sm:$0xff]
  %v82 = vld [vmem:[%s1 + $0x38] sm:$0xff]
  %v83 = vld [vmem:[%s1 + $0x40] sm:$0xff]
  %v84 = vld [vmem:[%s1 + $0x48] sm:$0xff]
  %v85 = vld [vmem:[%s1 + $0x50] sm:$0xff]
  %v86 = vld [vmem:[%s1 + $0x58] sm:$0xff]
  %v87 = vld [vmem:[%s1 + $0x60] sm:$0xff]
  %v88 = vld [vmem:[%s1 + $0x68] sm:$0xff]
  %v89 = vld [vmem:[%s1 + $0x70] sm:$0xff]
  %v90 = vld [vmem:[%s1 + $0x78] sm:$0xff]
  %v91 = vld [vmem:[%s1 + $0x80] sm:$0xff]
  %v92 = vld [vmem:[%s1 + $0x88] sm:$0xff]
  %v93 = vld [vmem:[%s1 + $0x90] sm:$0xff]
  %v94 = vld [vmem:[%s1 + $0x98] sm:$0xff]
  %v95 = vld [vmem:[%s1 + $0xa0] sm:$0xff]
  %v96 = vld [vmem:[%s1 + $0xa8] sm:$0xff]
  %v97 = vld [vmem:[%s1 + $0xb0] sm:$0xff]
  %v98 = vld [vmem:[%s1 + $0xb8] sm:$0xff]
  %v99 = vld [vmem:[%s1 + $0xc0] sm:$0xff]
  %v100 = vld [vmem:[%s1 + $0xc8] sm:$0xff]
  %v101 = vld [vmem:[%s1 + $0xd0] sm:$0xff]
  %v102 = vld [vmem:[%s1 + $0xd8] sm:$0xff]
  %v103 = vld [vmem:[%s1 + $0xe0] sm:$0xff]
  %v104 = vld [vmem:[%s1 + $0xe8] sm:$0xff]
  %v105 = vld [vmem:[%s1 + $0xf0] sm:$0xff]
  %v106 = vld [vmem:[%s1 + $0xf8] sm:$0xff]
  %v107 = vld [vmem:[%s1 + $0x100] sm:$0xff]
  %v108 = vld [vmem:[%s1 + $0x108] sm:$0xff]
  %v109 = vld [vmem:[%s1 + $0x110] sm:$0xff]
  %v110 = vld [vmem:[%s1 + $0x118] sm:$0xff]
  %v111 = vld [vmem:[%s1 + $0x120] sm:$0xff]
  %v112 = vld [vmem:[%s1 + $0x128] sm:$0xff]
  %v113 = vld [vmem:[%s1 + $0x130] sm:$0xff]
  %v114 = vld [vmem:[%s1 + $0x138] sm:$0xff]
  %v115 = vld [vmem:[%s1 + $0x140] sm:$0xff]
  %v116 = vld [vmem:[%s1 + $0x148] sm:$0xff]
  %v117 = vld [vmem:[%s1 + $0x150] sm:$0xff]
  %v118 = vld [vmem:[%s1 + $0x158] sm:$0xff]
  %v119 = vld [vmem:[%s1 + $0x160] sm:$0xff]
  %v120 = vld [vmem:[%s1 + $0x168] sm:$0xff]
  %v121 = vld [vmem:[%s1 + $0x170] sm:$0xff]
  %v122 = vld [vmem:[%s1 + $0x178] sm:$0xff]
  %123 = vmatprep.subr.mxu0 %v121
  %124 = vmatpush1.msra.mxu0 %v120
  %125 = vmatprep.subr.mxu0 %v118
  %126 = vmatpush1.msra.mxu0 %v117
  %127 = vmatprep.subr.mxu0 %v115
  %128 = vmatpush1.msra.mxu0 %v114
  %129 = vmatprep.subr.mxu0 %v112
  %130 = vmatpush1.msra.mxu0 %v111
  %131 = vmatprep.subr.mxu0 %v109
  %132 = vmatpush1.msra.mxu0 %v108
  %133 = vmatprep.subr.mxu0 %v106
  %134 = vmatpush1.msra.mxu0 %v105
  %135 = vmatprep.subr.mxu0 %v103
  %136 = vmatpush1.msra.mxu0 %v102
  %137 = vmatprep.subr.mxu0 %v100
  %138 = vmatpush1.msra.mxu0 %v99
  %139 = vmatprep.subr.mxu0 %v97
  %140 = vmatpush1.msra.mxu0 %v96
  %141 = vmatprep.subr.mxu0 %v94
  %142 = vmatpush1.msra.mxu0 %v93
  %143 = vmatprep.subr.mxu0 %v91
  %144 = vmatpush1.msra.mxu0 %v90
  %145 = vmatprep.subr.mxu0 %v88
  %146 = vmatpush1.msra.mxu0 %v87
  %147 = vmatprep.subr.mxu0 %v85
  %148 = vmatpush1.msra.mxu0 %v84
  %149 = vmatprep.subr.mxu0 %v82
  %150 = vmatpush1.msra.mxu0 %v81
  %151 = vmatprep.subr.mxu0 %v79
  %152 = vmatpush1.msra.mxu0 %v78
  %153 = vmatprep.subr.mxu0 %v76
  %154 = vmatpush1.msra.mxu0 %v75
  %155 = vmatprep.subr.mxu0 0.0
  %156 = vmatpush2.msra.mxu0 0.0
  %157 = vmatprep.subr.mxu0 0.0
  %158 = vmatpush2.msra.mxu0 0.0
  %159 = vmatprep.subr.mxu0 0.0
  %160 = vmatpush2.msra.mxu0 0.0
  %161 = vmatprep.subr.mxu0 0.0
  %162 = vmatpush2.msra.mxu0 0.0
  %163 = vmatprep.subr.mxu0 0.0
  %164 = vmatpush2.msra.mxu0 0.0
  %165 = vmatprep.subr.mxu0 0.0
  %166 = vmatpush2.msra.mxu0 0.0
  %167 = vmatprep.subr.mxu0 0.0
  %168 = vmatpush2.msra.mxu0 0.0
  %169 = vmatprep.subr.mxu0 0.0
  %170 = vmatpush2.msra.mxu0 0.0
  %171 = vmatprep.subr.mxu0 0.0
  %172 = vmatpush2.msra.mxu0 0.0
  %173 = vmatprep.subr.mxu0 0.0
  %174 = vmatpush2.msra.mxu0 0.0
  %175 = vmatprep.subr.mxu0 0.0
  %176 = vmatpush2.msra.mxu0 0.0
  %177 = vmatprep.subr.mxu0 0.0
  %178 = vmatpush2.msra.mxu0 0.0
  %179 = vmatprep.subr.mxu0 0.0
  %180 = vmatpush2.msra.mxu0 0.0
  %181 = vmatprep.subr.mxu0 0.0
  %182 = vmatpush2.msra.mxu0 0.0
  %183 = vmatprep.subr.mxu0 0.0
  %184 = vmatpush2.msra.mxu0 0.0
  %185 = vmatprep.subr.mxu0 0.0
  %186 = vmatpush2.msra.mxu0 0.0
  %187 = vmatprep.mubr.f32.mxu0 0.0
  %188 = vmatmul.mubr.f32.gmra.mxu0 %v26
  %v189 = vpop.f32.mrf.mxu0
  %v190 = vadd.f32 0.0, %v189
  %v191 = vpop.f32.mrf.mxu0
  %v192 = vadd.f32 0.0, %v191
  %193 = vmatprep.mubr.f32.mxu0 0.0
  %194 = vmatmul.mubr.f32.gmra.mxu0 %v27
  %v195 = vpop.f32.mrf.mxu0
  %v196 = vadd.f32 0.0, %v195
  %v197 = vpop.f32.mrf.mxu0
  %v198 = vadd.f32 0.0, %v197
  %199 = vdwg.mxu0
  %200 = vmatprep.subr.mxu0 0.0
  %201 = vmatpush1.msra.mxu0 %v122
  %202 = vmatprep.subr.mxu0 0.0
  %203 = vmatpush1.msra.mxu0 %v119
  %204 = vmatprep.subr.mxu0 0.0
  %205 = vmatpush1.msra.mxu0 %v116
  %206 = vmatprep.subr.mxu0 0.0
  %207 = vmatpush1.msra.mxu0 %v113
  %208 = vmatprep.subr.mxu0 0.0
  %209 = vmatpush1.msra.mxu0 %v110
  %210 = vmatprep.subr.mxu0 0.0
  %211 = vmatpush1.msra.mxu0 %v107
  %212 = vmatprep.subr.mxu0 0.0
  %213 = vmatpush1.msra.mxu0 %v104
  %214 = vmatprep.subr.mxu0 0.0
  %215 = vmatpush1.msra.mxu0 %v101
  %216 = vmatprep.subr.mxu0 0.0
  %217 = vmatpush1.msra.mxu0 %v98
  %218 = vmatprep.subr.mxu0 0.0
  %219 = vmatpush1.msra.mxu0 %v95
  %220 = vmatprep.subr.mxu0 0.0
  %221 = vmatpush1.msra.mxu0 %v92
  %222 = vmatprep.subr.mxu0 0.0
  %223 = vmatpush1.msra.mxu0 %v89
  %224 = vmatprep.subr.mxu0 0.0
  %225 = vmatpush1.msra.mxu0 %v86
  %226 = vmatprep.subr.mxu0 0.0
  %227 = vmatpush1.msra.mxu0 %v83
  %228 = vmatprep.subr.mxu0 0.0
  %229 = vmatpush1.msra.mxu0 %v80
  %230 = vmatprep.subr.mxu0 0.0
  %231 = vmatpush1.msra.mxu0 %v77
  %232 = vmatprep.subr.mxu0 0.0
  %233 = vmatpush2.msra.mxu0 0.0
  %234 = vmatprep.subr.mxu0 0.0
  %235 = vmatpush2.msra.mxu0 0.0
  %236 = vmatprep.subr.mxu0 0.0
  %237 = vmatpush2.msra.mxu0 0.0
  %238 = vmatprep.subr.mxu0 0.0
  %239 = vmatpush2.msra.mxu0 0.0
  %240 = vmatprep.subr.mxu0 0.0
  %241 = vmatpush2.msra.mxu0 0.0
  %242 = vmatprep.subr.mxu0 0.0
  %243 = vmatpush2.msra.mxu0 0.0
  %244 = vmatprep.subr.mxu0 0.0
  %245 = vmatpush2.msra.mxu0 0.0
  %246 = vmatprep.subr.mxu0 0.0
  %247 = vmatpush2.msra.mxu0 0.0
  %248 = vmatprep.subr.mxu0 0.0
  %249 = vmatpush2.msra.mxu0 0.0
  %250 = vmatprep.subr.mxu0 0.0
  %251 = vmatpush2.msra.mxu0 0.0
  %252 = vmatprep.subr.mxu0 0.0
  %253 = vmatpush2.msra.mxu0 0.0
  %254 = vmatprep.subr.mxu0 0.0
  %255 = vmatpush2.msra.mxu0 0.0
  %256 = vmatprep.subr.mxu0 0.0
  %257 = vmatpush2.msra.mxu0 0.0
  %258 = vmatprep.subr.mxu0 0.0
  %259 = vmatpush2.msra.mxu0 0.0
  %260 = vmatprep.subr.mxu0 0.0
  %261 = vmatpush2.msra.mxu0 0.0
  %262 = vmatprep.subr.mxu0 0.0
  %263 = vmatpush2.msra.mxu0 0.0
  %264 = vmatprep.mubr.f32.mxu0 0.0
  %265 = vmatmul.mubr.f32.gmra.mxu0 %v26
  %v266 = vpop.f32.mrf.mxu0
  %v267 = vadd.f32 0.0, %v266
  %v268 = vpop.f32.mrf.mxu0
  %269 = vmatprep.mubr.f32.mxu0 0.0
  %270 = vmatmul.mubr.f32.gmra.mxu0 %v27
  %v271 = vpop.f32.mrf.mxu0
  %v272 = vadd.f32 0.0, %v271
  %v273 = vpop.f32.mrf.mxu0
  %274 = vdwg.mxu0
  %vm277 = vcmask 1040384
  %v278 = vrot.slane %v190, 7
  %v279 = vrot.slane %v196, 7
  %v280 = vsel %vm277, %v278, %v279
  %v283 = vsel %vm277, 0.0, %v278
  %v284 = vsel %vm71, %v283, 0.0
  %v285 = vsel %vm72, %v280, 0.0
  %v286 = vadd.f32 %v192, %v284
  %v287 = vadd.f32 %v198, %v285
  %v288 = vadd.f32 %v286, %v287
  %v289 = vrot.slane %v288, 4
  %v290 = vadd.f32 %v288, %v289
  %v291 = vrot.slane %v290, 2
  %v292 = vadd.f32 %v290, %v291
  %v293 = vrot.slane %v292, 1
  %v294 = vadd.f32 %v292, %v293
  %v295 = vmul.f32 %v286, %v286
  %v296 = vmul.f32 %v287, %v287
  %v297 = vadd.f32 %v295, %v296
  %v298 = vrot.slane %v297, 4
  %v299 = vadd.f32 %v297, %v298
  %v300 = vrot.slane %v299, 2
  %v301 = vadd.f32 %v299, %v300
  %v302 = vrot.slane %v301, 1
  %v303 = vadd.f32 %v301, %v302
  %v304 = vadd.f32 %v267, %v272
  %v305 = vrot.slane %v304, 4
  %v306 = vadd.f32 %v304, %v305
  %v307 = vrot.slane %v306, 2
  %v308 = vadd.f32 %v306, %v307
  %v309 = vrot.slane %v308, 1
  %v310 = vadd.f32 %v308, %v309
  %v311 = vmul.f32 %v267, %v267
  %v312 = vmul.f32 %v272, %v272
  %v313 = vadd.f32 %v311, %v312
  %v314 = vrot.slane %v313, 4
  %v315 = vadd.f32 %v313, %v314
  %v316 = vrot.slane %v315, 2
  %v317 = vadd.f32 %v315, %v316
  %v318 = vrot.slane %v317, 1
  %v319 = vadd.f32 %v317, %v318
  %v320 = vsel %vm277, %v294, %v303
  %vm321 = vcmask 1041408
  %v322 = vsel %vm321, %v320, %v310
  %vm323 = vcmask 1042432
  %v324 = vsel %vm323, %v322, %v319
  %325 = vmatprep.subr.mxu0 0.0
  %326 = vmatpush1.msra.mxu0 %v43
  %327 = vmatprep.subr.mxu0 0.0
  %328 = vmatpush1.msra.mxu0 %v42
  %329 = vmatprep.subr.mxu0 0.0
  %330 = vmatpush1.msra.mxu0 %v41
  %331 = vmatprep.subr.mxu0 0.0
  %332 = vmatpush1.msra.mxu0 %v40
  %333 = vmatprep.subr.mxu0 0.0
  %334 = vmatpush1.msra.mxu0 %v39
  %335 = vmatprep.subr.mxu0 0.0
  %336 = vmatpush1.msra.mxu0 %v38
  %337 = vmatprep.subr.mxu0 0.0
  %338 = vmatpush1.msra.mxu0 %v37
  %339 = vmatprep.subr.mxu0 0.0
  %340 = vmatpush1.msra.mxu0 %v36
  %341 = vmatprep.subr.mxu0 0.0
  %342 = vmatpush1.msra.mxu0 %v35
  %343 = vmatprep.subr.mxu0 0.0
  %344 = vmatpush1.msra.mxu0 %v34
  %345 = vmatprep.subr.mxu0 0.0
  %346 = vmatpush1.msra.mxu0 %v33
  %347 = vmatprep.subr.mxu0 0.0
  %348 = vmatpush1.msra.mxu0 %v32
  %349 = vmatprep.subr.mxu0 0.0
  %350 = vmatpush1.msra.mxu0 %v31
  %351 = vmatprep.subr.mxu0 0.0
  %352 = vmatpush1.msra.mxu0 %v30
  %353 = vmatprep.subr.mxu0 0.0
  %354 = vmatpush1.msra.mxu0 %v29
  %355 = vmatprep.subr.mxu0 0.0
  %356 = vmatpush1.msra.mxu0 %v28
  %357 = vmatprep.subr.mxu0 0.0
  %358 = vmatpush2.msra.mxu0 0.0
  %359 = vmatprep.subr.mxu0 0.0
  %360 = vmatpush2.msra.mxu0 0.0
  %361 = vmatprep.subr.mxu0 0.0
  %362 = vmatpush2.msra.mxu0 0.0
  %363 = vmatprep.subr.mxu0 0.0
  %364 = vmatpush2.msra.mxu0 0.0
  %365 = vmatprep.subr.mxu0 0.0
  %366 = vmatpush2.msra.mxu0 0.0
  %367 = vmatprep.subr.mxu0 0.0
  %368 = vmatpush2.msra.mxu0 0.0
  %369 = vmatprep.subr.mxu0 0.0
  %370 = vmatpush2.msra.mxu0 0.0
  %371 = vmatprep.subr.mxu0 0.0
  %372 = vmatpush2.msra.mxu0 0.0
  %373 = vmatprep.subr.mxu0 0.0
  %374 = vmatpush2.msra.mxu0 0.0
  %375 = vmatprep.subr.mxu0 0.0
  %376 = vmatpush2.msra.mxu0 0.0
  %377 = vmatprep.subr.mxu0 0.0
  %378 = vmatpush2.msra.mxu0 0.0
  %379 = vmatprep.subr.mxu0 0.0
  %380 = vmatpush2.msra.mxu0 0.0
  %381 = vmatprep.subr.mxu0 0.0
  %382 = vmatpush2.msra.mxu0 0.0
  %383 = vmatprep.subr.mxu0 0.0
  %384 = vmatpush2.msra.mxu0 0.0
  %385 = vmatprep.subr.mxu0 0.0
  %386 = vmatpush2.msra.mxu0 0.0
  %387 = vmatprep.subr.mxu0 0.0
  %388 = vmatpush2.msra.mxu0 0.0
  %389 = vmatprep.mubr.f32.mxu0 0.0
  %390 = vmatmul.mubr.f32.gmra.mxu0 %v324
  %v391 = vpop.f32.mrf.mxu0
  %v392 = vadd.f32 0.0, %v391
  %v393 = vpop.f32.mrf.mxu0
  %394 = vdwg.mxu0
  %v395 = vld [vmem:[%s4] sm:$0x3]
  %v396 = vmul.f32 %v392, 0.0078125
  %v397 = vmul.f32 %v396, %v396
  %v399 = vrot.slane %v397, 7
  %v401 = vsub.f32 %v396, %v399
  %v402 = vmax.f32 %v401, 0.0
  %v403 = vadd.f32 %v402, 1e-05
  %v404 = vrsqrt.pop %v403
  %v406 = vrot.slane %v404, 1
  %v408 = vmul.f32 %v395, %v406
  %v409 = vmul.f32 %v396, %v408
  %v411 = vrot.slane %v409, 7
  %v413 = vsub.f32 %v395, %v411
  %v414 = vsel %vm277, %v408, %v413
  %416 = vrot.lane.b32.xlu0 %v414, 16
  %v417 = vpop.permute.xlu0 %416
  %419 = vrot.lane.b32.xlu0 %v414, 32
  %v420 = vpop.permute.xlu0 %419
  %422 = vrot.lane.b32.xlu0 %v414, 48
  %v423 = vpop.permute.xlu0 %422
  %425 = vrot.lane.b32.xlu0 %v414, 64
  %v426 = vpop.permute.xlu0 %425
  %428 = vrot.lane.b32.xlu0 %v414, 80
  %v429 = vpop.permute.xlu0 %428
  %431 = vrot.lane.b32.xlu0 %v414, 96
  %v432 = vpop.permute.xlu0 %431
  %434 = vrot.lane.b32.xlu0 %v414, 112
  %v435 = vpop.permute.xlu0 %434
  %vm437 = vcmask 130048
  %v438 = vsel %vm437, %v414, %v417
  %vm439 = vcmask 261120
  %v440 = vsel %vm439, %v438, %v420
  %vm441 = vcmask 392192
  %v442 = vsel %vm441, %v440, %v423
  %vm443 = vcmask 523264
  %v444 = vsel %vm443, %v442, %v426
  %vm445 = vcmask 654336
  %v446 = vsel %vm445, %v444, %v429
  %vm447 = vcmask 785408
  %v448 = vsel %vm447, %v446, %v432
  %vm449 = vcmask 916480
  %v450 = vsel %vm449, %v448, %v435
  %v451 = vld [vmem:[%s6] sm:$0x3]
  %v452 = vrot.slane %v404, 3
  %v454 = vmul.f32 %v451, %v452
  %v456 = vrot.slane %v454, 6
  %v458 = vmul.f32 %v396, %v456
  %v460 = vrot.slane %v458, 1
  %v462 = vsub.f32 %v451, %v460
  %v463 = vsel %vm277, %v454, %v462
  %465 = vrot.lane.b32.xlu0 %v463, 16
  %v466 = vpop.permute.xlu0 %465
  %468 = vrot.lane.b32.xlu0 %v463, 32
  %v469 = vpop.permute.xlu0 %468
  %471 = vrot.lane.b32.xlu0 %v463, 48
  %v472 = vpop.permute.xlu0 %471
  %474 = vrot.lane.b32.xlu0 %v463, 64
  %v475 = vpop.permute.xlu0 %474
  %477 = vrot.lane.b32.xlu0 %v463, 80
  %v478 = vpop.permute.xlu0 %477
  %480 = vrot.lane.b32.xlu0 %v463, 96
  %v481 = vpop.permute.xlu0 %480
  %483 = vrot.lane.b32.xlu0 %v463, 112
  %v484 = vpop.permute.xlu0 %483
  %v486 = vsel %vm437, %v463, %v466
  %v487 = vsel %vm439, %v486, %v469
  %v488 = vsel %vm441, %v487, %v472
  %v489 = vsel %vm443, %v488, %v475
  %v490 = vsel %vm445, %v489, %v478
  %v491 = vsel %vm447, %v490, %v481
  %v492 = vsel %vm449, %v491, %v484
  %v493 = vlaneseq
  %v494 = vshrl.u32 %v493, 7
  %v495 = vsub.s32 0, %v494
  %v496 = vrot.slane %v450, %v495
  %v497 = vmul.f32 %v286, %v496
  %v498 = vmul.f32 %v287, %v496
  %v499 = vlaneseq
  %v500 = vshrl.u32 %v499, 7
  %v501 = vsub.s32 1, %v500
  %v502 = vrot.slane %v450, %v501
  %v503 = vadd.f32 %v497, %v502
  %v504 = vadd.f32 %v498, %v502
  %v505 = vmax.f32 %v503, 0.0
  %v506 = vmax.f32 %v504, 0.0
  %v507 = vld [vmem:[%s2] sm:$0xff]
  %v508 = vld [vmem:[%s2 + $0x8] sm:$0xff]
  %v509 = vld [vmem:[%s2 + $0x10] sm:$0xff]
  %v510 = vld [vmem:[%s2 + $0x18] sm:$0xff]
  %v511 = vld [vmem:[%s2 + $0x20] sm:$0xff]
  %v512 = vld [vmem:[%s2 + $0x28] sm:$0xff]
  %v513 = vld [vmem:[%s2 + $0x30] sm:$0xff]
  %v514 = vld [vmem:[%s2 + $0x38] sm:$0xff]
  %v515 = vld [vmem:[%s2 + $0x40] sm:$0xff]
  %v516 = vld [vmem:[%s2 + $0x48] sm:$0xff]
  %v517 = vld [vmem:[%s2 + $0x50] sm:$0xff]
  %v518 = vld [vmem:[%s2 + $0x58] sm:$0xff]
  %v519 = vld [vmem:[%s2 + $0x60] sm:$0xff]
  %v520 = vld [vmem:[%s2 + $0x68] sm:$0xff]
  %v521 = vld [vmem:[%s2 + $0x70] sm:$0xff]
  %v522 = vld [vmem:[%s2 + $0x78] sm:$0xff]
  %v523 = vld [vmem:[%s2 + $0x80] sm:$0xff]
  %v524 = vld [vmem:[%s2 + $0x88] sm:$0xff]
  %v525 = vld [vmem:[%s2 + $0x90] sm:$0xff]
  %v526 = vld [vmem:[%s2 + $0x98] sm:$0xff]
  %v527 = vld [vmem:[%s2 + $0xa0] sm:$0xff]
  %v528 = vld [vmem:[%s2 + $0xa8] sm:$0xff]
  %v529 = vld [vmem:[%s2 + $0xb0] sm:$0xff]
  %v530 = vld [vmem:[%s2 + $0xb8] sm:$0xff]
  %v531 = vld [vmem:[%s2 + $0xc0] sm:$0xff]
  %v532 = vld [vmem:[%s2 + $0xc8] sm:$0xff]
  %v533 = vld [vmem:[%s2 + $0xd0] sm:$0xff]
  %v534 = vld [vmem:[%s2 + $0xd8] sm:$0xff]
  %v535 = vld [vmem:[%s2 + $0xe0] sm:$0xff]
  %v536 = vld [vmem:[%s2 + $0xe8] sm:$0xff]
  %v537 = vld [vmem:[%s2 + $0xf0] sm:$0xff]
  %v538 = vld [vmem:[%s2 + $0xf8] sm:$0xff]
  %v539 = vld [vmem:[%s2 + $0x100] sm:$0xff]
  %v540 = vld [vmem:[%s2 + $0x108] sm:$0xff]
  %v541 = vld [vmem:[%s2 + $0x110] sm:$0xff]
  %v542 = vld [vmem:[%s2 + $0x118] sm:$0xff]
  %v543 = vld [vmem:[%s2 + $0x120] sm:$0xff]
  %v544 = vld [vmem:[%s2 + $0x128] sm:$0xff]
  %v545 = vld [vmem:[%s2 + $0x130] sm:$0xff]
  %v546 = vld [vmem:[%s2 + $0x138] sm:$0xff]
  %v547 = vld [vmem:[%s2 + $0x140] sm:$0xff]
  %v548 = vld [vmem:[%s2 + $0x148] sm:$0xff]
  %v549 = vld [vmem:[%s2 + $0x150] sm:$0xff]
  %v550 = vld [vmem:[%s2 + $0x158] sm:$0xff]
  %v551 = vld [vmem:[%s2 + $0x160] sm:$0xff]
  %v552 = vld [vmem:[%s2 + $0x168] sm:$0xff]
  %v553 = vld [vmem:[%s2 + $0x170] sm:$0xff]
  %v554 = vld [vmem:[%s2 + $0x178] sm:$0xff]
  %555 = vmatprep.subr.mxu0 %v553
  %556 = vmatpush1.msra.mxu0 %v552
  %557 = vmatprep.subr.mxu0 %v550
  %558 = vmatpush1.msra.mxu0 %v549
  %559 = vmatprep.subr.mxu0 %v547
  %560 = vmatpush1.msra.mxu0 %v546
  %561 = vmatprep.subr.mxu0 %v544
  %562 = vmatpush1.msra.mxu0 %v543
  %563 = vmatprep.subr.mxu0 %v541
  %564 = vmatpush1.msra.mxu0 %v540
  %565 = vmatprep.subr.mxu0 %v538
  %566 = vmatpush1.msra.mxu0 %v537
  %567 = vmatprep.subr.mxu0 %v535
  %568 = vmatpush1.msra.mxu0 %v534
  %569 = vmatprep.subr.mxu0 %v532
  %570 = vmatpush1.msra.mxu0 %v531
  %571 = vmatprep.subr.mxu0 %v529
  %572 = vmatpush1.msra.mxu0 %v528
  %573 = vmatprep.subr.mxu0 %v526
  %574 = vmatpush1.msra.mxu0 %v525
  %575 = vmatprep.subr.mxu0 %v523
  %576 = vmatpush1.msra.mxu0 %v522
  %577 = vmatprep.subr.mxu0 %v520
  %578 = vmatpush1.msra.mxu0 %v519
  %579 = vmatprep.subr.mxu0 %v517
  %580 = vmatpush1.msra.mxu0 %v516
  %581 = vmatprep.subr.mxu0 %v514
  %582 = vmatpush1.msra.mxu0 %v513
  %583 = vmatprep.subr.mxu0 %v511
  %584 = vmatpush1.msra.mxu0 %v510
  %585 = vmatprep.subr.mxu0 %v508
  %586 = vmatpush1.msra.mxu0 %v507
  %587 = vmatprep.subr.mxu0 0.0
  %588 = vmatpush2.msra.mxu0 0.0
  %589 = vmatprep.subr.mxu0 0.0
  %590 = vmatpush2.msra.mxu0 0.0
  %591 = vmatprep.subr.mxu0 0.0
  %592 = vmatpush2.msra.mxu0 0.0
  %593 = vmatprep.subr.mxu0 0.0
  %594 = vmatpush2.msra.mxu0 0.0
  %595 = vmatprep.subr.mxu0 0.0
  %596 = vmatpush2.msra.mxu0 0.0
  %597 = vmatprep.subr.mxu0 0.0
  %598 = vmatpush2.msra.mxu0 0.0
  %599 = vmatprep.subr.mxu0 0.0
  %600 = vmatpush2.msra.mxu0 0.0
  %601 = vmatprep.subr.mxu0 0.0
  %602 = vmatpush2.msra.mxu0 0.0
  %603 = vmatprep.subr.mxu0 0.0
  %604 = vmatpush2.msra.mxu0 0.0
  %605 = vmatprep.subr.mxu0 0.0
  %606 = vmatpush2.msra.mxu0 0.0
  %607 = vmatprep.subr.mxu0 0.0
  %608 = vmatpush2.msra.mxu0 0.0
  %609 = vmatprep.subr.mxu0 0.0
  %610 = vmatpush2.msra.mxu0 0.0
  %611 = vmatprep.subr.mxu0 0.0
  %612 = vmatpush2.msra.mxu0 0.0
  %613 = vmatprep.subr.mxu0 0.0
  %614 = vmatpush2.msra.mxu0 0.0
  %615 = vmatprep.subr.mxu0 0.0
  %616 = vmatpush2.msra.mxu0 0.0
  %617 = vmatprep.subr.mxu0 0.0
  %618 = vmatpush2.msra.mxu0 0.0
  %619 = vmatprep.mubr.f32.mxu0 0.0
  %620 = vmatmul.mubr.f32.gmra.mxu0 %v505
  %v621 = vpop.f32.mrf.mxu0
  %v622 = vadd.f32 0.0, %v621
  %v623 = vpop.f32.mrf.mxu0
  %v624 = vadd.f32 0.0, %v623
  %625 = vmatprep.mubr.f32.mxu0 0.0
  %626 = vmatmul.mubr.f32.gmra.mxu0 %v506
  %v627 = vpop.f32.mrf.mxu0
  %v628 = vadd.f32 0.0, %v627
  %v629 = vpop.f32.mrf.mxu0
  %v630 = vadd.f32 0.0, %v629
  %631 = vdwg.mxu0
  %632 = vmatprep.subr.mxu0 0.0
  %633 = vmatpush1.msra.mxu0 %v554
  %634 = vmatprep.subr.mxu0 0.0
  %635 = vmatpush1.msra.mxu0 %v551
  %636 = vmatprep.subr.mxu0 0.0
  %637 = vmatpush1.msra.mxu0 %v548
  %638 = vmatprep.subr.mxu0 0.0
  %639 = vmatpush1.msra.mxu0 %v545
  %640 = vmatprep.subr.mxu0 0.0
  %641 = vmatpush1.msra.mxu0 %v542
  %642 = vmatprep.subr.mxu0 0.0
  %643 = vmatpush1.msra.mxu0 %v539
  %644 = vmatprep.subr.mxu0 0.0
  %645 = vmatpush1.msra.mxu0 %v536
  %646 = vmatprep.subr.mxu0 0.0
  %647 = vmatpush1.msra.mxu0 %v533
  %648 = vmatprep.subr.mxu0 0.0
  %649 = vmatpush1.msra.mxu0 %v530
  %650 = vmatprep.subr.mxu0 0.0
  %651 = vmatpush1.msra.mxu0 %v527
  %652 = vmatprep.subr.mxu0 0.0
  %653 = vmatpush1.msra.mxu0 %v524
  %654 = vmatprep.subr.mxu0 0.0
  %655 = vmatpush1.msra.mxu0 %v521
  %656 = vmatprep.subr.mxu0 0.0
  %657 = vmatpush1.msra.mxu0 %v518
  %658 = vmatprep.subr.mxu0 0.0
  %659 = vmatpush1.msra.mxu0 %v515
  %660 = vmatprep.subr.mxu0 0.0
  %661 = vmatpush1.msra.mxu0 %v512
  %662 = vmatprep.subr.mxu0 0.0
  %663 = vmatpush1.msra.mxu0 %v509
  %664 = vmatprep.subr.mxu0 0.0
  %665 = vmatpush2.msra.mxu0 0.0
  %666 = vmatprep.subr.mxu0 0.0
  %667 = vmatpush2.msra.mxu0 0.0
  %668 = vmatprep.subr.mxu0 0.0
  %669 = vmatpush2.msra.mxu0 0.0
  %670 = vmatprep.subr.mxu0 0.0
  %671 = vmatpush2.msra.mxu0 0.0
  %672 = vmatprep.subr.mxu0 0.0
  %673 = vmatpush2.msra.mxu0 0.0
  %674 = vmatprep.subr.mxu0 0.0
  %675 = vmatpush2.msra.mxu0 0.0
  %676 = vmatprep.subr.mxu0 0.0
  %677 = vmatpush2.msra.mxu0 0.0
  %678 = vmatprep.subr.mxu0 0.0
  %679 = vmatpush2.msra.mxu0 0.0
  %680 = vmatprep.subr.mxu0 0.0
  %681 = vmatpush2.msra.mxu0 0.0
  %682 = vmatprep.subr.mxu0 0.0
  %683 = vmatpush2.msra.mxu0 0.0
  %684 = vmatprep.subr.mxu0 0.0
  %685 = vmatpush2.msra.mxu0 0.0
  %686 = vmatprep.subr.mxu0 0.0
  %687 = vmatpush2.msra.mxu0 0.0
  %688 = vmatprep.subr.mxu0 0.0
  %689 = vmatpush2.msra.mxu0 0.0
  %690 = vmatprep.subr.mxu0 0.0
  %691 = vmatpush2.msra.mxu0 0.0
  %692 = vmatprep.subr.mxu0 0.0
  %693 = vmatpush2.msra.mxu0 0.0
  %694 = vmatprep.subr.mxu0 0.0
  %695 = vmatpush2.msra.mxu0 0.0
  %696 = vmatprep.mubr.f32.mxu0 0.0
  %697 = vmatmul.mubr.f32.gmra.mxu0 %v505
  %v698 = vpop.f32.mrf.mxu0
  %v699 = vadd.f32 0.0, %v698
  %v700 = vpop.f32.mrf.mxu0
  %701 = vmatprep.mubr.f32.mxu0 0.0
  %702 = vmatmul.mubr.f32.gmra.mxu0 %v506
  %v703 = vpop.f32.mrf.mxu0
  %v704 = vadd.f32 0.0, %v703
  %v705 = vpop.f32.mrf.mxu0
  %706 = vdwg.mxu0
  %v709 = vrot.slane %v622, 7
  %v710 = vrot.slane %v628, 7
  %v711 = vsel %vm277, %v709, %v710
  %v714 = vsel %vm277, 0.0, %v709
  %v715 = vsel %vm71, %v714, 0.0
  %v716 = vsel %vm72, %v711, 0.0
  %v717 = vadd.f32 %v624, %v715
  %v718 = vadd.f32 %v630, %v716
  %vm721 = vcmask 1046528
  %v722 = vrot.slane %v699, 1
  %v723 = vrot.slane %v704, 1
  %v724 = vsel %vm721, %v722, %v723
  %v727 = vsel %vm721, %v723, 0.0
  %v728 = vsel %vm73, %v724, 0.0
  %v729 = vsel %vm74, %v727, 0.0
  %v730 = vadd.f32 %v717, %v728
  %v731 = vadd.f32 %v718, %v729
  %v732 = vadd.f32 %v730, %v731
  %v733 = vrot.slane %v732, 4
  %v734 = vadd.f32 %v732, %v733
  %v735 = vrot.slane %v734, 2
  %v736 = vadd.f32 %v734, %v735
  %v737 = vrot.slane %v736, 1
  %v738 = vadd.f32 %v736, %v737
  %v739 = vmul.f32 %v730, %v730
  %v740 = vmul.f32 %v731, %v731
  %v741 = vadd.f32 %v739, %v740
  %v742 = vrot.slane %v741, 4
  %v743 = vadd.f32 %v741, %v742
  %v744 = vrot.slane %v743, 2
  %v745 = vadd.f32 %v743, %v744
  %v746 = vrot.slane %v745, 1
  %v747 = vadd.f32 %v745, %v746
  %v748 = vsel %vm277, %v738, %v747
  %749 = vmatprep.subr.mxu0 0.0
  %750 = vmatpush1.msra.mxu0 %v43
  %751 = vmatprep.subr.mxu0 0.0
  %752 = vmatpush1.msra.mxu0 %v42
  %753 = vmatprep.subr.mxu0 0.0
  %754 = vmatpush1.msra.mxu0 %v41
  %755 = vmatprep.subr.mxu0 0.0
  %756 = vmatpush1.msra.mxu0 %v40
  %757 = vmatprep.subr.mxu0 0.0
  %758 = vmatpush1.msra.mxu0 %v39
  %759 = vmatprep.subr.mxu0 0.0
  %760 = vmatpush1.msra.mxu0 %v38
  %761 = vmatprep.subr.mxu0 0.0
  %762 = vmatpush1.msra.mxu0 %v37
  %763 = vmatprep.subr.mxu0 0.0
  %764 = vmatpush1.msra.mxu0 %v36
  %765 = vmatprep.subr.mxu0 0.0
  %766 = vmatpush1.msra.mxu0 %v35
  %767 = vmatprep.subr.mxu0 0.0
  %768 = vmatpush1.msra.mxu0 %v34
  %769 = vmatprep.subr.mxu0 0.0
  %770 = vmatpush1.msra.mxu0 %v33
  %771 = vmatprep.subr.mxu0 0.0
  %772 = vmatpush1.msra.mxu0 %v32
  %773 = vmatprep.subr.mxu0 0.0
  %774 = vmatpush1.msra.mxu0 %v31
  %775 = vmatprep.subr.mxu0 0.0
  %776 = vmatpush1.msra.mxu0 %v30
  %777 = vmatprep.subr.mxu0 0.0
  %778 = vmatpush1.msra.mxu0 %v29
  %779 = vmatprep.subr.mxu0 0.0
  %780 = vmatpush1.msra.mxu0 %v28
  %781 = vmatprep.subr.mxu0 0.0
  %782 = vmatpush2.msra.mxu0 0.0
  %783 = vmatprep.subr.mxu0 0.0
  %784 = vmatpush2.msra.mxu0 0.0
  %785 = vmatprep.subr.mxu0 0.0
  %786 = vmatpush2.msra.mxu0 0.0
  %787 = vmatprep.subr.mxu0 0.0
  %788 = vmatpush2.msra.mxu0 0.0
  %789 = vmatprep.subr.mxu0 0.0
  %790 = vmatpush2.msra.mxu0 0.0
  %791 = vmatprep.subr.mxu0 0.0
  %792 = vmatpush2.msra.mxu0 0.0
  %793 = vmatprep.subr.mxu0 0.0
  %794 = vmatpush2.msra.mxu0 0.0
  %795 = vmatprep.subr.mxu0 0.0
  %796 = vmatpush2.msra.mxu0 0.0
  %797 = vmatprep.subr.mxu0 0.0
  %798 = vmatpush2.msra.mxu0 0.0
  %799 = vmatprep.subr.mxu0 0.0
  %800 = vmatpush2.msra.mxu0 0.0
  %801 = vmatprep.subr.mxu0 0.0
  %802 = vmatpush2.msra.mxu0 0.0
  %803 = vmatprep.subr.mxu0 0.0
  %804 = vmatpush2.msra.mxu0 0.0
  %805 = vmatprep.subr.mxu0 0.0
  %806 = vmatpush2.msra.mxu0 0.0
  %807 = vmatprep.subr.mxu0 0.0
  %808 = vmatpush2.msra.mxu0 0.0
  %809 = vmatprep.subr.mxu0 0.0
  %810 = vmatpush2.msra.mxu0 0.0
  %811 = vmatprep.subr.mxu0 0.0
  %812 = vmatpush2.msra.mxu0 0.0
  %813 = vmatprep.mubr.f32.mxu0 0.0
  %814 = vmatmul.mubr.f32.gmra.mxu0 %v748
  %v815 = vpop.f32.mrf.mxu0
  %v816 = vadd.f32 0.0, %v815
  %v817 = vpop.f32.mrf.mxu0
  %818 = vdwg.mxu0
  %v819 = vld [vmem:[%s5] sm:$0x3]
  %v820 = vmul.f32 %v816, 0.0078125
  %v821 = vmul.f32 %v820, %v820
  %v823 = vrot.slane %v821, 7
  %v825 = vsub.f32 %v820, %v823
  %v826 = vmax.f32 %v825, 0.0
  %v827 = vadd.f32 %v826, 1e-05
  %v828 = vrsqrt.pop %v827
  %v830 = vrot.slane %v828, 1
  %v832 = vmul.f32 %v819, %v830
  %v833 = vmul.f32 %v820, %v832
  %v835 = vrot.slane %v833, 7
  %v837 = vsub.f32 %v819, %v835
  %v838 = vsel %vm277, %v832, %v837
  %840 = vrot.lane.b32.xlu0 %v838, 16
  %v841 = vpop.permute.xlu0 %840
  %843 = vrot.lane.b32.xlu0 %v838, 32
  %v844 = vpop.permute.xlu0 %843
  %846 = vrot.lane.b32.xlu0 %v838, 48
  %v847 = vpop.permute.xlu0 %846
  %849 = vrot.lane.b32.xlu0 %v838, 64
  %v850 = vpop.permute.xlu0 %849
  %852 = vrot.lane.b32.xlu0 %v838, 80
  %v853 = vpop.permute.xlu0 %852
  %855 = vrot.lane.b32.xlu0 %v838, 96
  %v856 = vpop.permute.xlu0 %855
  %858 = vrot.lane.b32.xlu0 %v838, 112
  %v859 = vpop.permute.xlu0 %858
  %v861 = vsel %vm437, %v838, %v841
  %v862 = vsel %vm439, %v861, %v844
  %v863 = vsel %vm441, %v862, %v847
  %v864 = vsel %vm443, %v863, %v850
  %v865 = vsel %vm445, %v864, %v853
  %v866 = vsel %vm447, %v865, %v856
  %v867 = vsel %vm449, %v866, %v859
  %v868 = vlaneseq
  %v869 = vshrl.u32 %v868, 7
  %v870 = vsub.s32 0, %v869
  %v871 = vrot.slane %v867, %v870
  %v872 = vmul.f32 %v730, %v871
  %v873 = vmul.f32 %v731, %v871
  %v874 = vlaneseq
  %v875 = vshrl.u32 %v874, 7
  %v876 = vsub.s32 0, %v875
  %v877 = vrot.slane %v492, %v876
  %v878 = vmul.f32 %v267, %v877
  %v879 = vmul.f32 %v272, %v877
  %v880 = vadd.f32 %v872, %v878
  %v881 = vadd.f32 %v873, %v879
  %v882 = vadd.f32 %v867, %v492
  %v883 = vlaneseq
  %v884 = vshrl.u32 %v883, 7
  %v885 = vsub.s32 1, %v884
  %v886 = vrot.slane %v882, %v885
  %v887 = vadd.f32 %v880, %v886
  %v888 = vadd.f32 %v881, %v886
  %v889 = vmax.f32 %v887, 0.0
  %v890 = vmax.f32 %v888, 0.0
  %891 = vst [vmem:[%s7] sm:$0xff] %v889
  %892 = vst [vmem:[%s7 + $0x8] sm:$0xff] %v890
  // Predicated region
  $region30: #{restnet_down_block.1} parent=0 // pred_check
    _
  $region31: #{restnet_down_block.1} parent=0 // pred_check_branch
    %894 = sbr.rel (0) target = $region33
  $region32: #{restnet_down_block.1} parent=0 // pred_region
    _
  $region33: #{restnet_down_block.1} parent=0 // pred_fallthru
    _
  // Predicated region
  $region34: #{restnet_down_block.1} parent=0 // pred_check
    _
  $region35: #{restnet_down_block.1} parent=0 // pred_check_branch
    %896 = sbr.rel (0) target = $region37
  $region36: #{restnet_down_block.1} parent=0 // pred_region
    _
  $region37: #{restnet_down_block.1} parent=0 // pred_fallthru
    _

</llo_original>
